<compile_context>
chip_gen: v6e
topology: v6e:2x2x1
jax: 0.10.0
libtpu: 0.0.40
codegen_flags: <defaults>
</compile_context>

<pallas_src>
import functools

import jax
import jax.numpy as jnp
from jax.experimental import pallas as pl
from jax.experimental.pallas import tpu as pltpu

IN_DIM = 10
HID_DIM = 10
OUT_DIM = 1

LANE = 128
DEFAULT_TILE_B = 8192   # ~12 MiB of VMEM incl. padded-lane input double-buffer
MAX_TILE_B = 16384      # ~25 MiB; stays under the 32 MiB scoped-VMEM limit we request


def _round_up(n, m):
    return ((n + m - 1) // m) * m


def _mlp_kernel(x_ref, p_ref, o_ref):
    """One batch tile.

    x_ref: (tile_b, IN_DIM)        batch-major input block, exactly as stored in HBM.
    p_ref: (3, HID_DIM, IN_DIM+1)  packed [W | b] parameters (row 1.. of layer 3 are 0).
    o_ref: (OUT_DIM, tile_b)       lane-dense output block (batch on the 128-lane axis).
    """
    x = x_ref[...].astype(jnp.float32)        # widen bf16 inputs; no-op for f32
    p = p_ref[...]

    w1, b1 = p[0, :, :IN_DIM], p[0, :, IN_DIM:]        # (10, 10), (10, 1)
    w2, b2 = p[1, :, :HID_DIM], p[1, :, HID_DIM:]      # (10, 10), (10, 1)
    w3, b3 = p[2, :OUT_DIM, :HID_DIM], p[2, :OUT_DIM, HID_DIM:]   # (1, 10), (1, 1)

    # Layer 1 (MXU): W1 @ x^T expressed as an A.B^T contraction.  This fuses the
    # batch-major -> feature-major reorientation with the first Linear; the result
    # (10, tile_b) has the batch on lanes, lane-dense for everything downstream.
    h1 = jax.lax.dot_general(w1, x, (((1,), (1,)), ((), ())),
                             preferred_element_type=jnp.float32)
    h1 = jnp.maximum(h1 + b1, 0.0)                      # (10, tile_b)

    # Layer 2 (VPU): a 10-wide contraction is ~0.15-0.6% efficient on the padded MXU,
    # so accumulate 10 broadcast multiply-adds: (10,1) weight columns broadcast along
    # lanes x (1,tile_b) activation rows broadcast along sublanes, f32 accumulation.
    acc = w2[:, 0:1] * h1[0:1, :]
    for k in range(1, HID_DIM):
        acc = acc + w2[:, k:k + 1] * h1[k:k + 1, :]
    h2 = jnp.maximum(acc + b2, 0.0)                     # (10, tile_b)

    # Layer 3 (VPU): single output row.
    z = w3[:, 0:1] * h2[0:1, :]
    for k in range(1, HID_DIM):
        z = z + w3[:, k:k + 1] * h2[k:k + 1, :]
    z = z + b3                                          # (1, tile_b)

    # Numerically-stable sigmoid (== jax.nn.sigmoid): never exponentiates a positive
    # argument; exp lands on the otherwise-idle EUP slot.
    pos = z >= 0.0
    e = jnp.exp(jnp.where(pos, -z, z))
    r = 1.0 / (1.0 + e)
    o_ref[...] = jnp.where(pos, r, e * r).astype(o_ref.dtype)


def _choose_tile_b(batch, tile_b):
    """Lane-aligned batch tile with a VMEM budget and >=2 grid steps when possible."""
    tile_b = DEFAULT_TILE_B if tile_b is None else int(tile_b)
    tile_b = max(LANE, _round_up(tile_b, LANE))     # validate/round to 128-lane multiple
    tile_b = min(tile_b, MAX_TILE_B)                # (tile_b, 10) pads to 128 lanes in VMEM
    # Give v7x's two TensorCores at least one grid step each whenever batch >= 256.
    tile_b = min(tile_b, max(LANE, _round_up(pl.cdiv(batch, 2), LANE)))
    if batch <= tile_b:
        # Single block covering the whole (possibly tiny / ragged) batch: block dims
        # equal the full array dims, which is always legal.
        return batch
    return tile_b


def _pack_params(params):
    """Pack the six weight/bias arrays into one (3, HID, IN+1) [W | b] array so the
    kernel has a single small constant input stream instead of six tiny DMAs."""
    p = jnp.zeros((3, HID_DIM, IN_DIM + 1), jnp.float32)
    p = p.at[0, :, :IN_DIM].set(params["w1"])
    p = p.at[0, :, IN_DIM].set(params["b1"])
    p = p.at[1, :, :HID_DIM].set(params["w2"])
    p = p.at[1, :, HID_DIM].set(params["b2"])
    p = p.at[2, :OUT_DIM, :HID_DIM].set(params["w3"])
    p = p.at[2, :OUT_DIM, HID_DIM].set(params["b3"])
    return p


@functools.partial(jax.jit, static_argnames=("tile_b",))
def classifier_forward(x, params, *, tile_b=None):
    """Forward pass.  x: (B, 10) float32 or bfloat16.  Returns (B, 1) float32."""
    if x.ndim != 2 or x.shape[1] != IN_DIM:
        raise ValueError(f"expected (B, {IN_DIM}) input, got {x.shape}")
    batch = x.shape[0]
    tb = _choose_tile_b(batch, tile_b)
    grid = (pl.cdiv(batch, tb),)

    packed = _pack_params(params)

    cost = pl.CostEstimate(
        flops=2 * (IN_DIM * HID_DIM + HID_DIM * HID_DIM + HID_DIM * OUT_DIM) * batch,
        transcendentals=batch,
        bytes_accessed=(x.size * x.dtype.itemsize
                        + batch * OUT_DIM * 4
                        + packed.size * 4),
    )

    out_fm = pl.pallas_call(
        _mlp_kernel,
        out_shape=jax.ShapeDtypeStruct((OUT_DIM, batch), jnp.float32),
        grid=grid,
        in_specs=[
            # Batch-major input consumed in place: no wrapper transpose / pad copies.
            pl.BlockSpec((tb, IN_DIM), lambda i: (i, 0)),
            # Single packed parameter block, identical for every grid step.
            pl.BlockSpec((3, HID_DIM, IN_DIM + 1), lambda i: (0, 0, 0)),
        ],
        # Lane-dense output block: full-width, unmasked vector stores.
        out_specs=pl.BlockSpec((OUT_DIM, tb), lambda i: (0, i)),
        compiler_params=pltpu.CompilerParams(
            dimension_semantics=("parallel",),      # pipelined DMA; 2-TC sharding on v7x
            vmem_limit_bytes=32 * 1024 * 1024,      # >= budget; valid on v5e/v6e/v7x
        ),
        cost_estimate=cost,
    )(x, packed)

    # (1, B) -> (B, 1): contiguous row-major reshape, no data movement.
    return out_fm.reshape(batch, OUT_DIM)


def init_params(key):
    """PyTorch nn.Linear default init: U(-1/sqrt(fan_in), +1/sqrt(fan_in)).
    Weights in PyTorch (out_features, in_features) layout, biases as (out_features,)."""
    ks = jax.random.split(key, 6)

    def lin(kw, kb, fan_in, fan_out):
        bound = 1.0 / (fan_in ** 0.5)
        w = jax.random.uniform(kw, (fan_out, fan_in), jnp.float32, -bound, bound)
        b = jax.random.uniform(kb, (fan_out,), jnp.float32, -bound, bound)
        return w, b

    w1, b1 = lin(ks[0], ks[1], IN_DIM, HID_DIM)
    w2, b2 = lin(ks[2], ks[3], HID_DIM, HID_DIM)
    w3, b3 = lin(ks[4], ks[5], HID_DIM, OUT_DIM)
    return {"w1": w1, "b1": b1, "w2": w2, "b2": b2, "w3": w3, "b3": b3}


def _reference_forward(x, p):
    h1 = jnp.maximum(x @ p["w1"].T + p["b1"], 0.0)
    h2 = jnp.maximum(h1 @ p["w2"].T + p["b2"], 0.0)
    return jax.nn.sigmoid(h2 @ p["w3"].T + p["b3"])


if __name__ == "__main__":
    key = jax.random.PRNGKey(0)
    k_params, k_x1, k_x2 = jax.random.split(key, 3)
    params = init_params(k_params)

    # Small batch (8): single full-array block.
    x_small = jax.random.normal(k_x1, (8, IN_DIM), jnp.float32)
    out_small = jax.block_until_ready(classifier_forward(x_small, params))
    ref_small = _reference_forward(x_small, params)
    assert out_small.shape == (8, OUT_DIM)
    assert jnp.allclose(out_small, ref_small, atol=1e-5, rtol=1e-5)

    # Ragged batch (300): auto tile 256 -> 2 grid steps, uneven final block.
    x_big = jax.random.normal(k_x2, (300, IN_DIM), jnp.float32)
    out_big = jax.block_until_ready(classifier_forward(x_big, params))
    ref_big = _reference_forward(x_big, params)
    assert out_big.shape == (300, OUT_DIM)
    assert jnp.allclose(out_big, ref_big, atol=1e-5, rtol=1e-5)

    # Explicit small tile (128) -> 3 pipelined grid steps over the same data.
    out_tiled = jax.block_until_ready(classifier_forward(x_big, params, tile_b=128))
    assert jnp.allclose(out_tiled, ref_big, atol=1e-5, rtol=1e-5)

    # bf16 input path (useful when the producer already emits bf16); looser tolerance.
    out_bf16 = jax.block_until_ready(
        classifier_forward(x_small.astype(jnp.bfloat16), params))
    assert jnp.allclose(out_bf16, ref_small, atol=2e-2)

    print("KERNEL_OK")
</pallas_src>

<mosaic_0001>
module attributes {stable_mosaic.version = 11 : i64} {
  func.func @_mlp_kernel(%arg0: i32, %arg1: memref<8x10xf32, #tpu.memory_space<vmem>>, %arg2: memref<3x10x11xf32, #tpu.memory_space<vmem>>, %arg3: memref<1x8xf32, #tpu.memory_space<vmem>>) attributes {dimension_semantics = [#tpu.dimension_semantics<parallel>], iteration_bounds = array<i64: 1>, scalar_prefetch = 0 : i64, scratch_operands = 0 : i64, tpu.core_type = #tpu.core_type<tc>, window_params = [{transform_indices = @transform_0, window_bounds = array<i64: 8, 10>}, {pipeline_mode = #tpu.pipeline_mode<synchronous>, transform_indices = @transform_1, window_bounds = array<i64: 3, 10, 11>}, {transform_indices = @transform_2, window_bounds = array<i64: 1, 8>}]} {
    %c0 = arith.constant 0 : index
    %c0_0 = arith.constant 0 : index
    %0 = vector.load %arg1[%c0, %c0_0] : memref<8x10xf32, #tpu.memory_space<vmem>>, vector<8x10xf32>
    %c0_1 = arith.constant 0 : index
    %c0_2 = arith.constant 0 : index
    %c0_3 = arith.constant 0 : index
    %1 = vector.load %arg2[%c0_1, %c0_2, %c0_3] : memref<3x10x11xf32, #tpu.memory_space<vmem>>, vector<3x10x11xf32>
    %2 = vector.extract_strided_slice %1 {offsets = [0, 0, 0], sizes = [1, 10, 10], strides = [1, 1, 1]} : vector<3x10x11xf32> to vector<1x10x10xf32>
    %3 = vector.shape_cast %2 : vector<1x10x10xf32> to vector<10x10xf32>
    %4 = vector.extract_strided_slice %1 {offsets = [0, 0, 10], sizes = [1, 10, 1], strides = [1, 1, 1]} : vector<3x10x11xf32> to vector<1x10x1xf32>
    %5 = vector.shape_cast %4 : vector<1x10x1xf32> to vector<10x1xf32>
    %6 = vector.extract_strided_slice %1 {offsets = [1, 0, 0], sizes = [1, 10, 10], strides = [1, 1, 1]} : vector<3x10x11xf32> to vector<1x10x10xf32>
    %7 = vector.shape_cast %6 : vector<1x10x10xf32> to vector<10x10xf32>
    %8 = vector.extract_strided_slice %1 {offsets = [1, 0, 10], sizes = [1, 10, 1], strides = [1, 1, 1]} : vector<3x10x11xf32> to vector<1x10x1xf32>
    %9 = vector.shape_cast %8 : vector<1x10x1xf32> to vector<10x1xf32>
    %10 = vector.extract_strided_slice %1 {offsets = [2, 0, 0], sizes = [1, 1, 10], strides = [1, 1, 1]} : vector<3x10x11xf32> to vector<1x1x10xf32>
    %11 = vector.shape_cast %10 : vector<1x1x10xf32> to vector<1x10xf32>
    %12 = vector.extract_strided_slice %1 {offsets = [2, 0, 10], sizes = [1, 1, 1], strides = [1, 1, 1]} : vector<3x10x11xf32> to vector<1x1x1xf32>
    %13 = vector.shape_cast %12 : vector<1x1x1xf32> to vector<1x1xf32>
    %cst = arith.constant dense<0.000000e+00> : vector<10x8xf32>
    %14 = tpu.matmul %3, %0, %cst {dimension_numbers = #tpu.dot_dimension_numbers<[1], [1], [0], [0], [0, 0, 1, 0], [], []>} : vector<10x10xf32>, vector<8x10xf32>, vector<10x8xf32> -> vector<10x8xf32>
    %15 = vector.broadcast %5 : vector<10x1xf32> to vector<10x8xf32>
    %16 = arith.addf %14, %15 : vector<10x8xf32>
    %cst_4 = arith.constant 0.000000e+00 : f32
    %17 = vector.broadcast %cst_4 : f32 to vector<10x8xf32>
    %18 = arith.maximumf %16, %17 : vector<10x8xf32>
    %19 = vector.extract_strided_slice %7 {offsets = [0, 0], sizes = [10, 1], strides = [1, 1]} : vector<10x10xf32> to vector<10x1xf32>
    %20 = vector.extract_strided_slice %18 {offsets = [0, 0], sizes = [1, 8], strides = [1, 1]} : vector<10x8xf32> to vector<1x8xf32>
    %21 = vector.broadcast %19 : vector<10x1xf32> to vector<10x8xf32>
    %22 = vector.broadcast %20 : vector<1x8xf32> to vector<10x8xf32>
    %23 = arith.mulf %21, %22 : vector<10x8xf32>
    %24 = vector.extract_strided_slice %7 {offsets = [0, 1], sizes = [10, 1], strides = [1, 1]} : vector<10x10xf32> to vector<10x1xf32>
    %25 = vector.extract_strided_slice %18 {offsets = [1, 0], sizes = [1, 8], strides = [1, 1]} : vector<10x8xf32> to vector<1x8xf32>
    %26 = vector.broadcast %24 : vector<10x1xf32> to vector<10x8xf32>
    %27 = vector.broadcast %25 : vector<1x8xf32> to vector<10x8xf32>
    %28 = arith.mulf %26, %27 : vector<10x8xf32>
    %29 = arith.addf %23, %28 : vector<10x8xf32>
    %30 = vector.extract_strided_slice %7 {offsets = [0, 2], sizes = [10, 1], strides = [1, 1]} : vector<10x10xf32> to vector<10x1xf32>
    %31 = vector.extract_strided_slice %18 {offsets = [2, 0], sizes = [1, 8], strides = [1, 1]} : vector<10x8xf32> to vector<1x8xf32>
    %32 = vector.broadcast %30 : vector<10x1xf32> to vector<10x8xf32>
    %33 = vector.broadcast %31 : vector<1x8xf32> to vector<10x8xf32>
    %34 = arith.mulf %32, %33 : vector<10x8xf32>
    %35 = arith.addf %29, %34 : vector<10x8xf32>
    %36 = vector.extract_strided_slice %7 {offsets = [0, 3], sizes = [10, 1], strides = [1, 1]} : vector<10x10xf32> to vector<10x1xf32>
    %37 = vector.extract_strided_slice %18 {offsets = [3, 0], sizes = [1, 8], strides = [1, 1]} : vector<10x8xf32> to vector<1x8xf32>
    %38 = vector.broadcast %36 : vector<10x1xf32> to vector<10x8xf32>
    %39 = vector.broadcast %37 : vector<1x8xf32> to vector<10x8xf32>
    %40 = arith.mulf %38, %39 : vector<10x8xf32>
    %41 = arith.addf %35, %40 : vector<10x8xf32>
    %42 = vector.extract_strided_slice %7 {offsets = [0, 4], sizes = [10, 1], strides = [1, 1]} : vector<10x10xf32> to vector<10x1xf32>
    %43 = vector.extract_strided_slice %18 {offsets = [4, 0], sizes = [1, 8], strides = [1, 1]} : vector<10x8xf32> to vector<1x8xf32>
    %44 = vector.broadcast %42 : vector<10x1xf32> to vector<10x8xf32>
    %45 = vector.broadcast %43 : vector<1x8xf32> to vector<10x8xf32>
    %46 = arith.mulf %44, %45 : vector<10x8xf32>
    %47 = arith.addf %41, %46 : vector<10x8xf32>
    %48 = vector.extract_strided_slice %7 {offsets = [0, 5], sizes = [10, 1], strides = [1, 1]} : vector<10x10xf32> to vector<10x1xf32>
    %49 = vector.extract_strided_slice %18 {offsets = [5, 0], sizes = [1, 8], strides = [1, 1]} : vector<10x8xf32> to vector<1x8xf32>
    %50 = vector.broadcast %48 : vector<10x1xf32> to vector<10x8xf32>
    %51 = vector.broadcast %49 : vector<1x8xf32> to vector<10x8xf32>
    %52 = arith.mulf %50, %51 : vector<10x8xf32>
    %53 = arith.addf %47, %52 : vector<10x8xf32>
    %54 = vector.extract_strided_slice %7 {offsets = [0, 6], sizes = [10, 1], strides = [1, 1]} : vector<10x10xf32> to vector<10x1xf32>
    %55 = vector.extract_strided_slice %18 {offsets = [6, 0], sizes = [1, 8], strides = [1, 1]} : vector<10x8xf32> to vector<1x8xf32>
    %56 = vector.broadcast %54 : vector<10x1xf32> to vector<10x8xf32>
    %57 = vector.broadcast %55 : vector<1x8xf32> to vector<10x8xf32>
    %58 = arith.mulf %56, %57 : vector<10x8xf32>
    %59 = arith.addf %53, %58 : vector<10x8xf32>
    %60 = vector.extract_strided_slice %7 {offsets = [0, 7], sizes = [10, 1], strides = [1, 1]} : vector<10x10xf32> to vector<10x1xf32>
    %61 = vector.extract_strided_slice %18 {offsets = [7, 0], sizes = [1, 8], strides = [1, 1]} : vector<10x8xf32> to vector<1x8xf32>
    %62 = vector.broadcast %60 : vector<10x1xf32> to vector<10x8xf32>
    %63 = vector.broadcast %61 : vector<1x8xf32> to vector<10x8xf32>
    %64 = arith.mulf %62, %63 : vector<10x8xf32>
    %65 = arith.addf %59, %64 : vector<10x8xf32>
    %66 = vector.extract_strided_slice %7 {offsets = [0, 8], sizes = [10, 1], strides = [1, 1]} : vector<10x10xf32> to vector<10x1xf32>
    %67 = vector.extract_strided_slice %18 {offsets = [8, 0], sizes = [1, 8], strides = [1, 1]} : vector<10x8xf32> to vector<1x8xf32>
    %68 = vector.broadcast %66 : vector<10x1xf32> to vector<10x8xf32>
    %69 = vector.broadcast %67 : vector<1x8xf32> to vector<10x8xf32>
    %70 = arith.mulf %68, %69 : vector<10x8xf32>
    %71 = arith.addf %65, %70 : vector<10x8xf32>
    %72 = vector.extract_strided_slice %7 {offsets = [0, 9], sizes = [10, 1], strides = [1, 1]} : vector<10x10xf32> to vector<10x1xf32>
    %73 = vector.extract_strided_slice %18 {offsets = [9, 0], sizes = [1, 8], strides = [1, 1]} : vector<10x8xf32> to vector<1x8xf32>
    %74 = vector.broadcast %72 : vector<10x1xf32> to vector<10x8xf32>
    %75 = vector.broadcast %73 : vector<1x8xf32> to vector<10x8xf32>
    %76 = arith.mulf %74, %75 : vector<10x8xf32>
    %77 = arith.addf %71, %76 : vector<10x8xf32>
    %78 = vector.broadcast %9 : vector<10x1xf32> to vector<10x8xf32>
    %79 = arith.addf %77, %78 : vector<10x8xf32>
    %cst_5 = arith.constant 0.000000e+00 : f32
    %80 = vector.broadcast %cst_5 : f32 to vector<10x8xf32>
    %81 = arith.maximumf %79, %80 : vector<10x8xf32>
    %82 = vector.extract_strided_slice %11 {offsets = [0, 0], sizes = [1, 1], strides = [1, 1]} : vector<1x10xf32> to vector<1x1xf32>
    %83 = vector.extract_strided_slice %81 {offsets = [0, 0], sizes = [1, 8], strides = [1, 1]} : vector<10x8xf32> to vector<1x8xf32>
    %84 = vector.broadcast %82 : vector<1x1xf32> to vector<1x8xf32>
    %85 = arith.mulf %84, %83 : vector<1x8xf32>
    %86 = vector.extract_strided_slice %11 {offsets = [0, 1], sizes = [1, 1], strides = [1, 1]} : vector<1x10xf32> to vector<1x1xf32>
    %87 = vector.extract_strided_slice %81 {offsets = [1, 0], sizes = [1, 8], strides = [1, 1]} : vector<10x8xf32> to vector<1x8xf32>
    %88 = vector.broadcast %86 : vector<1x1xf32> to vector<1x8xf32>
    %89 = arith.mulf %88, %87 : vector<1x8xf32>
    %90 = arith.addf %85, %89 : vector<1x8xf32>
    %91 = vector.extract_strided_slice %11 {offsets = [0, 2], sizes = [1, 1], strides = [1, 1]} : vector<1x10xf32> to vector<1x1xf32>
    %92 = vector.extract_strided_slice %81 {offsets = [2, 0], sizes = [1, 8], strides = [1, 1]} : vector<10x8xf32> to vector<1x8xf32>
    %93 = vector.broadcast %91 : vector<1x1xf32> to vector<1x8xf32>
    %94 = arith.mulf %93, %92 : vector<1x8xf32>
    %95 = arith.addf %90, %94 : vector<1x8xf32>
    %96 = vector.extract_strided_slice %11 {offsets = [0, 3], sizes = [1, 1], strides = [1, 1]} : vector<1x10xf32> to vector<1x1xf32>
    %97 = vector.extract_strided_slice %81 {offsets = [3, 0], sizes = [1, 8], strides = [1, 1]} : vector<10x8xf32> to vector<1x8xf32>
    %98 = vector.broadcast %96 : vector<1x1xf32> to vector<1x8xf32>
    %99 = arith.mulf %98, %97 : vector<1x8xf32>
    %100 = arith.addf %95, %99 : vector<1x8xf32>
    %101 = vector.extract_strided_slice %11 {offsets = [0, 4], sizes = [1, 1], strides = [1, 1]} : vector<1x10xf32> to vector<1x1xf32>
    %102 = vector.extract_strided_slice %81 {offsets = [4, 0], sizes = [1, 8], strides = [1, 1]} : vector<10x8xf32> to vector<1x8xf32>
    %103 = vector.broadcast %101 : vector<1x1xf32> to vector<1x8xf32>
    %104 = arith.mulf %103, %102 : vector<1x8xf32>
    %105 = arith.addf %100, %104 : vector<1x8xf32>
    %106 = vector.extract_strided_slice %11 {offsets = [0, 5], sizes = [1, 1], strides = [1, 1]} : vector<1x10xf32> to vector<1x1xf32>
    %107 = vector.extract_strided_slice %81 {offsets = [5, 0], sizes = [1, 8], strides = [1, 1]} : vector<10x8xf32> to vector<1x8xf32>
    %108 = vector.broadcast %106 : vector<1x1xf32> to vector<1x8xf32>
    %109 = arith.mulf %108, %107 : vector<1x8xf32>
    %110 = arith.addf %105, %109 : vector<1x8xf32>
    %111 = vector.extract_strided_slice %11 {offsets = [0, 6], sizes = [1, 1], strides = [1, 1]} : vector<1x10xf32> to vector<1x1xf32>
    %112 = vector.extract_strided_slice %81 {offsets = [6, 0], sizes = [1, 8], strides = [1, 1]} : vector<10x8xf32> to vector<1x8xf32>
    %113 = vector.broadcast %111 : vector<1x1xf32> to vector<1x8xf32>
    %114 = arith.mulf %113, %112 : vector<1x8xf32>
    %115 = arith.addf %110, %114 : vector<1x8xf32>
    %116 = vector.extract_strided_slice %11 {offsets = [0, 7], sizes = [1, 1], strides = [1, 1]} : vector<1x10xf32> to vector<1x1xf32>
    %117 = vector.extract_strided_slice %81 {offsets = [7, 0], sizes = [1, 8], strides = [1, 1]} : vector<10x8xf32> to vector<1x8xf32>
    %118 = vector.broadcast %116 : vector<1x1xf32> to vector<1x8xf32>
    %119 = arith.mulf %118, %117 : vector<1x8xf32>
    %120 = arith.addf %115, %119 : vector<1x8xf32>
    %121 = vector.extract_strided_slice %11 {offsets = [0, 8], sizes = [1, 1], strides = [1, 1]} : vector<1x10xf32> to vector<1x1xf32>
    %122 = vector.extract_strided_slice %81 {offsets = [8, 0], sizes = [1, 8], strides = [1, 1]} : vector<10x8xf32> to vector<1x8xf32>
    %123 = vector.broadcast %121 : vector<1x1xf32> to vector<1x8xf32>
    %124 = arith.mulf %123, %122 : vector<1x8xf32>
    %125 = arith.addf %120, %124 : vector<1x8xf32>
    %126 = vector.extract_strided_slice %11 {offsets = [0, 9], sizes = [1, 1], strides = [1, 1]} : vector<1x10xf32> to vector<1x1xf32>
    %127 = vector.extract_strided_slice %81 {offsets = [9, 0], sizes = [1, 8], strides = [1, 1]} : vector<10x8xf32> to vector<1x8xf32>
    %128 = vector.broadcast %126 : vector<1x1xf32> to vector<1x8xf32>
    %129 = arith.mulf %128, %127 : vector<1x8xf32>
    %130 = arith.addf %125, %129 : vector<1x8xf32>
    %131 = vector.broadcast %13 : vector<1x1xf32> to vector<1x8xf32>
    %132 = arith.addf %130, %131 : vector<1x8xf32>
    %cst_6 = arith.constant 0.000000e+00 : f32
    %133 = vector.broadcast %cst_6 : f32 to vector<1x8xf32>
    %134 = arith.cmpf oge, %132, %133 : vector<1x8xf32>
    %cst_7 = arith.constant 0.000000e+00 : f32
    %135 = vector.broadcast %cst_7 : f32 to vector<1x8xf32>
    %136 = arith.subf %135, %132 : vector<1x8xf32>
    %137 = arith.select %134, %136, %132 : vector<1x8xi1>, vector<1x8xf32>
    %138 = math.exp %137 : vector<1x8xf32>
    %cst_8 = arith.constant 1.000000e+00 : f32
    %139 = vector.broadcast %cst_8 : f32 to vector<1x8xf32>
    %140 = arith.addf %139, %138 : vector<1x8xf32>
    %cst_9 = arith.constant 1.000000e+00 : f32
    %141 = vector.broadcast %cst_9 : f32 to vector<1x8xf32>
    %142 = arith.divf %141, %140 : vector<1x8xf32>
    %143 = arith.mulf %138, %142 : vector<1x8xf32>
    %144 = arith.select %134, %142, %143 : vector<1x8xi1>, vector<1x8xf32>
    %c0_10 = arith.constant 0 : index
    %c0_11 = arith.constant 0 : index
    %145 = vector.load %arg3[%c0_10, %c0_11] : memref<1x8xf32, #tpu.memory_space<vmem>>, vector<1x8xf32>
    tpu.vector_store %arg3[%c0_10, %c0_11], %144 {strides = array<i32>} : memref<1x8xf32, #tpu.memory_space<vmem>>, vector<1x8xf32>,
    return
  }
  func.func @transform_0(%arg0: i32) -> (i32, i32) {
    %c0_i32 = arith.constant 0 : i32
    %c0_i32_0 = arith.constant 0 : i32
    return %arg0, %c0_i32 : i32, i32
  }
  func.func @transform_1(%arg0: i32) -> (i32, i32, i32) {
    %c0_i32 = arith.constant 0 : i32
    %c0_i32_0 = arith.constant 0 : i32
    %c0_i32_1 = arith.constant 0 : i32
    %c0_i32_2 = arith.constant 0 : i32
    return %c0_i32, %c0_i32_0, %c0_i32_1 : i32, i32, i32
  }
  func.func @transform_2(%arg0: i32) -> (i32, i32) {
    %c0_i32 = arith.constant 0 : i32
    %c0_i32_0 = arith.constant 0 : i32
    return %c0_i32, %arg0 : i32, i32
  }
}

</mosaic_0001>

<llo_original>
// kernel: classifier_forward.1
$region0: #{classifier_forward.1}
  #allocation0 [shape = 'u32[]', space=smem, size = 0x4, offset = 0x4, fixed_abs, tag = 'smem constant byte address 0x4 - core index']
  #allocation1 [shape = 'u32[144,128]{1,0:T(1,128)}', space=vmem, size = 0x12000, scoped, tag = 'internal scratch']
  %s0 = inlined_call_operand.vmem [shape: f32[8,10], index: 0, kind: input, shape index: {}]
  %s1 = inlined_call_operand.vmem [shape: f32[3,10,11], index: 1, kind: input, shape index: {}]
  %s2 = inlined_call_operand.hbm [shape: f32[1,8], index: 2, kind: output, shape index: {}]
  %s3 = sld [smem:[#allocation0]]
  $region18: #{classifier_forward.1} parent=0
    _
  %s5 = ssub.s32 1, %s3
  %s6 = scalar_select 0, %s5, %s3
  $region1: #{classifier_forward.1} parent=0
    #allocation2 [shape = 'u8[512]{0}', space=vmem, size = 0x400, scoped, tag = 'output window, operand 0, single buffered']
    #allocation3 [shape = 's32[1]{0}', space=sflag, size = 0x4, scoped, tag = 'scoped memory for classifier_forward.1']
    %7 = vsyncpa [#allocation3], 0
    // Predicated region
    $region2: #{classifier_forward.1} parent=1 // pred_check
      _
    $region3: #{classifier_forward.1} parent=1 // pred_check_branch
      %9 = sbr.rel (0) target = $region5
    $region4: #{classifier_forward.1} parent=1 // pred_region
      _
    $region5: #{classifier_forward.1} parent=1 // pred_fallthru
      _
    // Predicated region
    $region6: #{classifier_forward.1} parent=1 // pred_check
      _
    $region7: #{classifier_forward.1} parent=1 // pred_check_branch
      %11 = sbr.rel (0) target = $region9
    $region8: #{classifier_forward.1} parent=1 // pred_region
      _
    $region9: #{classifier_forward.1} parent=1 // pred_fallthru
      _
    %v12 = vld [vmem:[%s0] sm:$0xff]
    %v13 = vld [vmem:[%s1] sm:$0xff]
    %v14 = vld [vmem:[%s1 + $0x8] sm:$0x3]
    %v15 = vld [vmem:[%s1 + $0x10] sm:$0xff]
    %v16 = vld [vmem:[%s1 + $0x18] sm:$0x3]
    %v17 = vld [vmem:[%s1 + $0x20] sm:$0xff]
    %19 = vset.pattern.permute.xlu0 10
    %20 = vperm.xlu0 %19, %v13
    %v21 = vpop.permute.xlu0 %20
    %24 = vset.pattern.permute.xlu0 10
    %25 = vperm.xlu0 %24, %v14
    %v26 = vpop.permute.xlu0 %25
    %vm28 = vcmask 80896
    %v29 = vsel %vm28, %v13, 0
    %v31 = vsel %vm28, %v14, 0
    %v34 = vsel %vm28, %v12, 0
    %36 = vmatprep.subr.mxu0 0.0
    %37 = vmatpush1.xpose.msra.mxu0 0.0
    %38 = vmatprep.subr.mxu0 0.0
    %39 = vmatpush1.xpose.msra.mxu0 0.0
    %40 = vmatprep.subr.mxu0 0.0
    %41 = vmatpush1.xpose.msra.mxu0 0.0
    %42 = vmatprep.subr.mxu0 0.0
    %43 = vmatpush1.xpose.msra.mxu0 0.0
    %44 = vmatprep.subr.mxu0 0.0
    %45 = vmatpush1.xpose.msra.mxu0 0.0
    %46 = vmatprep.subr.mxu0 0.0
    %47 = vmatpush1.xpose.msra.mxu0 0.0
    %48 = vmatprep.subr.mxu0 0.0
    %49 = vmatpush1.xpose.msra.mxu0 0.0
    %50 = vmatprep.subr.mxu0 0.0
    %51 = vmatpush1.xpose.msra.mxu0 0.0
    %52 = vmatprep.subr.mxu0 0.0
    %53 = vmatpush1.xpose.msra.mxu0 0.0
    %54 = vmatprep.subr.mxu0 0.0
    %55 = vmatpush1.xpose.msra.mxu0 0.0
    %56 = vmatprep.subr.mxu0 0.0
    %57 = vmatpush1.xpose.msra.mxu0 0.0
    %58 = vmatprep.subr.mxu0 0.0
    %59 = vmatpush1.xpose.msra.mxu0 0.0
    %60 = vmatprep.subr.mxu0 0.0
    %61 = vmatpush1.xpose.msra.mxu0 0.0
    %62 = vmatprep.subr.mxu0 0.0
    %63 = vmatpush1.xpose.msra.mxu0 0.0
    %64 = vmatprep.subr.mxu0 0.0
    %65 = vmatpush1.xpose.msra.mxu0 0.0
    %66 = vmatprep.subr.mxu0 0.0
    %67 = vmatpush1.xpose.msra.mxu0 %v34
    %68 = vmatprep.subr.mxu0 0.0
    %69 = vmatpush2.xpose.msra.mxu0 0.0
    %70 = vmatprep.subr.mxu0 0.0
    %71 = vmatpush2.xpose.msra.mxu0 0.0
    %72 = vmatprep.subr.mxu0 0.0
    %73 = vmatpush2.xpose.msra.mxu0 0.0
    %74 = vmatprep.subr.mxu0 0.0
    %75 = vmatpush2.xpose.msra.mxu0 0.0
    %76 = vmatprep.subr.mxu0 0.0
    %77 = vmatpush2.xpose.msra.mxu0 0.0
    %78 = vmatprep.subr.mxu0 0.0
    %79 = vmatpush2.xpose.msra.mxu0 0.0
    %80 = vmatprep.subr.mxu0 0.0
    %81 = vmatpush2.xpose.msra.mxu0 0.0
    %82 = vmatprep.subr.mxu0 0.0
    %83 = vmatpush2.xpose.msra.mxu0 0.0
    %84 = vmatprep.subr.mxu0 0.0
    %85 = vmatpush2.xpose.msra.mxu0 0.0
    %86 = vmatprep.subr.mxu0 0.0
    %87 = vmatpush2.xpose.msra.mxu0 0.0
    %88 = vmatprep.subr.mxu0 0.0
    %89 = vmatpush2.xpose.msra.mxu0 0.0
    %90 = vmatprep.subr.mxu0 0.0
    %91 = vmatpush2.xpose.msra.mxu0 0.0
    %92 = vmatprep.subr.mxu0 0.0
    %93 = vmatpush2.xpose.msra.mxu0 0.0
    %94 = vmatprep.subr.mxu0 0.0
    %95 = vmatpush2.xpose.msra.mxu0 0.0
    %96 = vmatprep.subr.mxu0 0.0
    %97 = vmatpush2.xpose.msra.mxu0 0.0
    %98 = vmatprep.subr.mxu0 0.0
    %99 = vmatpush2.xpose.msra.mxu0 0.0
    %100 = vmatprep.mubr.f32.mxu0 0.0
    %101 = vmatmul.mubr.f32.gmra.mxu0 %v29
    %v102 = vpop.f32.mrf.mxu0
    %v103 = vadd.f32 %v21, %v102
    %v104 = vpop.f32.mrf.mxu0
    %105 = vmatprep.mubr.f32.mxu0 0.0
    %106 = vmatmul.mubr.f32.gmra.mxu0 %v31
    %v107 = vpop.f32.mrf.mxu0
    %v108 = vadd.f32 %v26, %v107
    %v109 = vpop.f32.mrf.mxu0
    %110 = vdwg.mxu0
    %v111 = vmax.f32 %v103, 0.0
    %v112 = vmax.f32 %v108, 0.0
    %114 = vset.pattern.permute.xlu0 0
    %115 = vperm.xlu0 %114, %v15
    %v116 = vpop.permute.xlu0 %115
    %119 = vset.pattern.permute.xlu0 0
    %120 = vperm.xlu0 %119, %v16
    %v121 = vpop.permute.xlu0 %120
    %v123 = vlaneseq
    %v124 = vshrl.u32 %v123, 7
    %v125 = vsub.s32 0, %v124
    %v126 = vrot.slane %v111, %v125
    %v127 = vmul.f32 %v116, %v126
    %v128 = vmul.f32 %v121, %v126
    %129 = vset.pattern.permute.xlu0 1
    %130 = vperm.xlu0 %129, %v15
    %v131 = vpop.permute.xlu0 %130
    %133 = vset.pattern.permute.xlu0 1
    %134 = vperm.xlu0 %133, %v16
    %v135 = vpop.permute.xlu0 %134
    %v137 = vlaneseq
    %v138 = vshrl.u32 %v137, 7
    %v139 = vsub.s32 1, %v138
    %v140 = vrot.slane %v111, %v139
    %v141 = vmul.f32 %v131, %v140
    %v142 = vmul.f32 %v135, %v140
    %v143 = vadd.f32 %v127, %v141
    %v144 = vadd.f32 %v128, %v142
    %145 = vset.pattern.permute.xlu0 2
    %146 = vperm.xlu0 %145, %v15
    %v147 = vpop.permute.xlu0 %146
    %149 = vset.pattern.permute.xlu0 2
    %150 = vperm.xlu0 %149, %v16
    %v151 = vpop.permute.xlu0 %150
    %v153 = vlaneseq
    %v154 = vshrl.u32 %v153, 7
    %v155 = vsub.s32 2, %v154
    %v156 = vrot.slane %v111, %v155
    %v157 = vmul.f32 %v147, %v156
    %v158 = vmul.f32 %v151, %v156
    %v159 = vadd.f32 %v143, %v157
    %v160 = vadd.f32 %v144, %v158
    %161 = vset.pattern.permute.xlu0 3
    %162 = vperm.xlu0 %161, %v15
    %v163 = vpop.permute.xlu0 %162
    %165 = vset.pattern.permute.xlu0 3
    %166 = vperm.xlu0 %165, %v16
    %v167 = vpop.permute.xlu0 %166
    %v169 = vlaneseq
    %v170 = vshrl.u32 %v169, 7
    %v171 = vsub.s32 3, %v170
    %v172 = vrot.slane %v111, %v171
    %v173 = vmul.f32 %v163, %v172
    %v174 = vmul.f32 %v167, %v172
    %v175 = vadd.f32 %v159, %v173
    %v176 = vadd.f32 %v160, %v174
    %177 = vset.pattern.permute.xlu0 4
    %178 = vperm.xlu0 %177, %v15
    %v179 = vpop.permute.xlu0 %178
    %181 = vset.pattern.permute.xlu0 4
    %182 = vperm.xlu0 %181, %v16
    %v183 = vpop.permute.xlu0 %182
    %v185 = vlaneseq
    %v186 = vshrl.u32 %v185, 7
    %v187 = vsub.s32 4, %v186
    %v188 = vrot.slane %v111, %v187
    %v189 = vmul.f32 %v179, %v188
    %v190 = vmul.f32 %v183, %v188
    %v191 = vadd.f32 %v175, %v189
    %v192 = vadd.f32 %v176, %v190
    %193 = vset.pattern.permute.xlu0 5
    %194 = vperm.xlu0 %193, %v15
    %v195 = vpop.permute.xlu0 %194
    %197 = vset.pattern.permute.xlu0 5
    %198 = vperm.xlu0 %197, %v16
    %v199 = vpop.permute.xlu0 %198
    %v201 = vlaneseq
    %v202 = vshrl.u32 %v201, 7
    %v203 = vsub.s32 5, %v202
    %v204 = vrot.slane %v111, %v203
    %v205 = vmul.f32 %v195, %v204
    %v206 = vmul.f32 %v199, %v204
    %v207 = vadd.f32 %v191, %v205
    %v208 = vadd.f32 %v192, %v206
    %209 = vset.pattern.permute.xlu0 6
    %210 = vperm.xlu0 %209, %v15
    %v211 = vpop.permute.xlu0 %210
    %213 = vset.pattern.permute.xlu0 6
    %214 = vperm.xlu0 %213, %v16
    %v215 = vpop.permute.xlu0 %214
    %v217 = vlaneseq
    %v218 = vshrl.u32 %v217, 7
    %v219 = vsub.s32 6, %v218
    %v220 = vrot.slane %v111, %v219
    %v221 = vmul.f32 %v211, %v220
    %v222 = vmul.f32 %v215, %v220
    %v223 = vadd.f32 %v207, %v221
    %v224 = vadd.f32 %v208, %v222
    %225 = vset.pattern.permute.xlu0 7
    %226 = vperm.xlu0 %225, %v15
    %v227 = vpop.permute.xlu0 %226
    %229 = vset.pattern.permute.xlu0 7
    %230 = vperm.xlu0 %229, %v16
    %v231 = vpop.permute.xlu0 %230
    %v233 = vlaneseq
    %v234 = vshrl.u32 %v233, 7
    %v235 = vsub.s32 7, %v234
    %v236 = vrot.slane %v111, %v235
    %v237 = vmul.f32 %v227, %v236
    %v238 = vmul.f32 %v231, %v236
    %v239 = vadd.f32 %v223, %v237
    %v240 = vadd.f32 %v224, %v238
    %241 = vset.pattern.permute.xlu0 8
    %242 = vperm.xlu0 %241, %v15
    %v243 = vpop.permute.xlu0 %242
    %245 = vset.pattern.permute.xlu0 8
    %246 = vperm.xlu0 %245, %v16
    %v247 = vpop.permute.xlu0 %246
    %v249 = vlaneseq
    %v250 = vshrl.u32 %v249, 7
    %v251 = vsub.s32 0, %v250
    %v252 = vrot.slane %v112, %v251
    %v253 = vmul.f32 %v243, %v252
    %v254 = vmul.f32 %v247, %v252
    %v255 = vadd.f32 %v239, %v253
    %v256 = vadd.f32 %v240, %v254
    %257 = vset.pattern.permute.xlu0 9
    %258 = vperm.xlu0 %257, %v15
    %v259 = vpop.permute.xlu0 %258
    %261 = vset.pattern.permute.xlu0 9
    %262 = vperm.xlu0 %261, %v16
    %v263 = vpop.permute.xlu0 %262
    %v265 = vlaneseq
    %v266 = vshrl.u32 %v265, 7
    %v267 = vsub.s32 1, %v266
    %v268 = vrot.slane %v112, %v267
    %v269 = vmul.f32 %v259, %v268
    %v270 = vmul.f32 %v263, %v268
    %v271 = vadd.f32 %v255, %v269
    %v272 = vadd.f32 %v256, %v270
    %273 = vset.pattern.permute.xlu0 10
    %274 = vperm.xlu0 %273, %v15
    %v275 = vpop.permute.xlu0 %274
    %277 = vset.pattern.permute.xlu0 10
    %278 = vperm.xlu0 %277, %v16
    %v279 = vpop.permute.xlu0 %278
    %v281 = vadd.f32 %v271, %v275
    %v282 = vadd.f32 %v272, %v279
    %v283 = vmax.f32 %v281, 0.0
    %v284 = vmax.f32 %v282, 0.0
    %286 = vset.pattern.permute.xlu0 0
    %287 = vperm.xlu0 %286, %v17
    %v288 = vpop.permute.xlu0 %287
    %v290 = vmul.f32 %v288, %v283
    %291 = vset.pattern.permute.xlu0 1
    %292 = vperm.xlu0 %291, %v17
    %v293 = vpop.permute.xlu0 %292
    %v296 = vrot.slane %v283, 1
    %v298 = vmul.f32 %v293, %v296
    %v299 = vadd.f32 %v290, %v298
    %300 = vset.pattern.permute.xlu0 2
    %301 = vperm.xlu0 %300, %v17
    %v302 = vpop.permute.xlu0 %301
    %v304 = vrot.slane %v283, 2
    %v306 = vmul.f32 %v302, %v304
    %v307 = vadd.f32 %v299, %v306
    %308 = vset.pattern.permute.xlu0 3
    %309 = vperm.xlu0 %308, %v17
    %v310 = vpop.permute.xlu0 %309
    %v312 = vrot.slane %v283, 3
    %v314 = vmul.f32 %v310, %v312
    %v315 = vadd.f32 %v307, %v314
    %316 = vset.pattern.permute.xlu0 4
    %317 = vperm.xlu0 %316, %v17
    %v318 = vpop.permute.xlu0 %317
    %v320 = vrot.slane %v283, 4
    %v322 = vmul.f32 %v318, %v320
    %v323 = vadd.f32 %v315, %v322
    %324 = vset.pattern.permute.xlu0 5
    %325 = vperm.xlu0 %324, %v17
    %v326 = vpop.permute.xlu0 %325
    %v328 = vrot.slane %v283, 5
    %v330 = vmul.f32 %v326, %v328
    %v331 = vadd.f32 %v323, %v330
    %332 = vset.pattern.permute.xlu0 6
    %333 = vperm.xlu0 %332, %v17
    %v334 = vpop.permute.xlu0 %333
    %v336 = vrot.slane %v283, 6
    %v338 = vmul.f32 %v334, %v336
    %v339 = vadd.f32 %v331, %v338
    %340 = vset.pattern.permute.xlu0 7
    %341 = vperm.xlu0 %340, %v17
    %v342 = vpop.permute.xlu0 %341
    %v344 = vrot.slane %v283, 7
    %v346 = vmul.f32 %v342, %v344
    %v347 = vadd.f32 %v339, %v346
    %348 = vset.pattern.permute.xlu0 8
    %349 = vperm.xlu0 %348, %v17
    %v350 = vpop.permute.xlu0 %349
    %v352 = vmul.f32 %v350, %v284
    %v353 = vadd.f32 %v347, %v352
    %354 = vset.pattern.permute.xlu0 9
    %355 = vperm.xlu0 %354, %v17
    %v356 = vpop.permute.xlu0 %355
    %v359 = vrot.slane %v284, 1
    %v361 = vmul.f32 %v356, %v359
    %v362 = vadd.f32 %v353, %v361
    %363 = vset.pattern.permute.xlu0 10
    %364 = vperm.xlu0 %363, %v17
    %v365 = vpop.permute.xlu0 %364
    %v367 = vadd.f32 %v362, %v365
    %vm368 = vcmp.ge.f32.partialorder %v367, 0.0
    %v369 = vsub.f32 0.0, %v367
    %v370 = vsel %vm368, %v369, %v367
    %v371 = vmul.f32 %v370, 1.442695
    %v372 = vpow.pop %v371
    %v373 = vadd.f32 %v372, 1.0
    %v374 = vrcp.pop %v373
    %v375 = vmul.f32 1.0, %v374
    %v376 = vmul.f32 %v372, %v375
    %v377 = vsel %vm368, %v375, %v376
    %vm378 = vcmask 57344
    %379 = vst.msk [vmem:[#allocation2] sm:$0x1] %vm378, %v377
    // Predicated region
    $region10: #{classifier_forward.1} parent=1 // pred_check
      _
    $region11: #{classifier_forward.1} parent=1 // pred_check_branch
      %381 = sbr.rel (0) target = $region13
    $region12: #{classifier_forward.1} parent=1 // pred_region
      %s383 = ssub.s32 16, 16
      %384 = vsyncadd [#allocation3], %s383
      %s386 = sshll.u32 [#allocation2], 4
      %s387 = int_to_ptr.vmem [resolvable:$true] %s386
      %389 = dma.vmem_to_hbm [thread:$0]  %s387, 16, %s2, [#allocation3]
    $region13: #{classifier_forward.1} parent=1 // pred_fallthru
      _
    // Predicated region
    $region14: #{classifier_forward.1} parent=1 // pred_check
      _
    $region15: #{classifier_forward.1} parent=1 // pred_check_branch
      %391 = sbr.rel (0) target = $region17
    $region16: #{classifier_forward.1} parent=1 // pred_region
      %392 = dma.done [#allocation3], 16
    $region17: #{classifier_forward.1} parent=1 // pred_fallthru
      _
    %393 = vsyncpa [#allocation3], 1

</llo_original>
